<compile_context>
chip_gen: v7x
topology: tpu7x:2x2x1
jax: 0.10.0
libtpu: 0.0.40
codegen_flags: <defaults>
</compile_context>

<pallas_src>
import functools

import jax
import jax.numpy as jnp
from jax.experimental import pallas as pl
from jax.experimental.pallas import tpu as pltpu


def _round_up(x, m):
    return ((x + m - 1) // m) * m


# ----------------------- Stage 1: support = X @ W ----------------------------
def _support_kernel(x_ref, w_ref, out_ref):
    """support tile = X_tile @ W  (f32 MXU accumulation, store in adj dtype)."""
    out_ref[...] = jnp.dot(
        x_ref[...], w_ref[...], preferred_element_type=jnp.float32
    ).astype(out_ref.dtype)


# ------------- Stage 2: out = adj @ support (+ bias), K-tiled ----------------
def _aggregate_kernel(adj_ref, s_ref, out_ref, acc_ref):
    @pl.when(pl.program_id(1) == 0)
    def _():
        acc_ref[...] = jnp.zeros_like(acc_ref)

    acc_ref[...] += jnp.dot(
        adj_ref[...], s_ref[...], preferred_element_type=jnp.float32
    )

    @pl.when(pl.program_id(1) == pl.num_programs(1) - 1)
    def _():
        out_ref[...] = acc_ref[...].astype(out_ref.dtype)


def _aggregate_bias_kernel(adj_ref, s_ref, b_ref, out_ref, acc_ref):
    @pl.when(pl.program_id(1) == 0)
    def _():
        acc_ref[...] = jnp.zeros_like(acc_ref)

    acc_ref[...] += jnp.dot(
        adj_ref[...], s_ref[...], preferred_element_type=jnp.float32
    )

    @pl.when(pl.program_id(1) == pl.num_programs(1) - 1)
    def _():
        out_ref[...] = (acc_ref[...] + b_ref[...]).astype(out_ref.dtype)


def prepare_graph(adj, inputs, dtype=jnp.bfloat16):
    """One-time setup cast (adj is static across layers/steps): do NOT cast per call."""
    return adj.astype(dtype), inputs.astype(dtype)


def _tiles_for(n):
    """(tm row tile, tk contraction tile) for the aggregation stage."""
    if n >= 1024:
        return 512, 1024
    if n >= 512:
        return 512, 512
    t = _round_up(n, 128)
    return t, t


@functools.partial(jax.jit, static_argnames=("out_dtype",))
def graph_convolution(inputs, weight, adj, bias=None, *, out_dtype=jnp.float32):
    """GraphConvolution.forward in Pallas (dropout = identity / eval mode).

    inputs: (N, D_in), weight: (D_in, D_out), adj: (N, N), bias: (D_out,) or None.
    Pass inputs / adj already in bf16 (see prepare_graph) for best HBM behavior.
    """
    n, d_in = inputs.shape
    d_out = weight.shape[1]
    assert adj.shape == (n, n)

    tm, tk = _tiles_for(n)
    n_pad = _round_up(n, max(tm, tk))
    d_out_p = _round_up(d_out, 128)   # lane-dense output (no masked partial stores)

    w = weight.astype(inputs.dtype)   # tiny (D_in x D_out) cast, negligible
    b = None
    if bias is not None:
        b = bias.astype(jnp.float32).reshape(1, d_out)

    x, a = inputs, adj
    if n_pad != n:
        # Zero padding is inert: padded adj cols are zero, padded rows sliced off.
        x = jnp.pad(x, ((0, n_pad - n), (0, 0)))
        a = jnp.pad(a, ((0, n_pad - n), (0, n_pad - n)))
    if d_out_p != d_out:
        w = jnp.pad(w, ((0, 0), (0, d_out_p - d_out)))
        if b is not None:
            b = jnp.pad(b, ((0, 0), (0, d_out_p - d_out)))

    # ---- Stage 1: support = X @ W  (row-tiled, fully parallel grid) ----------
    support = pl.pallas_call(
        _support_kernel,
        out_shape=jax.ShapeDtypeStruct((n_pad, d_out_p), a.dtype),
        grid_spec=pltpu.PrefetchScalarGridSpec(
            num_scalar_prefetch=0,
            grid=(n_pad // tm,),
            in_specs=[
                pl.BlockSpec((tm, d_in), lambda i: (i, 0)),      # X row tile
                pl.BlockSpec((d_in, d_out_p), lambda i: (0, 0)), # W (resident, tiny)
            ],
            out_specs=pl.BlockSpec((tm, d_out_p), lambda i: (i, 0)),
        ),
        compiler_params=pltpu.CompilerParams(
            dimension_semantics=("parallel",),
        ),
    )(x, w)

    # ---- Stage 2: out = adj @ support (+ bias), K-tiled over nodes -----------
    grid = (n_pad // tm, n_pad // tk)
    adj_spec = pl.BlockSpec((tm, tk), lambda i, k: (i, k))
    s_spec = pl.BlockSpec((tk, d_out_p), lambda i, k: (k, 0))
    out_spec = pl.BlockSpec((tm, d_out_p), lambda i, k: (i, 0))
    scratch = [pltpu.VMEM((tm, d_out_p), jnp.float32)]
    cparams = pltpu.CompilerParams(
        dimension_semantics=("parallel", "arbitrary"),
    )

    if b is None:
        out = pl.pallas_call(
            _aggregate_kernel,
            out_shape=jax.ShapeDtypeStruct((n_pad, d_out_p), out_dtype),
            grid_spec=pltpu.PrefetchScalarGridSpec(
                num_scalar_prefetch=0,
                grid=grid,
                in_specs=[adj_spec, s_spec],
                out_specs=out_spec,
                scratch_shapes=scratch,
            ),
            compiler_params=cparams,
        )(a, support)
    else:
        bias_spec = pl.BlockSpec((1, d_out_p), lambda i, k: (0, 0))
        out = pl.pallas_call(
            _aggregate_bias_kernel,
            out_shape=jax.ShapeDtypeStruct((n_pad, d_out_p), out_dtype),
            grid_spec=pltpu.PrefetchScalarGridSpec(
                num_scalar_prefetch=0,
                grid=grid,
                in_specs=[adj_spec, s_spec, bias_spec],
                out_specs=out_spec,
                scratch_shapes=scratch,
            ),
            compiler_params=cparams,
        )(a, support, b)

    if n_pad != n or d_out_p != d_out:
        out = out[:n, :d_out]
    return out


def xavier_uniform(key, shape, dtype=jnp.float32):
    fan_in, fan_out = shape
    bound = jnp.sqrt(6.0 / (fan_in + fan_out))
    return jax.random.uniform(key, shape, dtype, minval=-bound, maxval=bound)


if __name__ == "__main__":
    # Small GCN: N=256 nodes, input_dim=128, output_dim=128.
    N, D_IN, D_OUT = 256, 128, 128

    key = jax.random.PRNGKey(0)
    k_x, k_w, k_a, k_b = jax.random.split(key, 4)

    inputs = jax.random.normal(k_x, (N, D_IN), dtype=jnp.float32)
    weight = xavier_uniform(k_w, (D_IN, D_OUT))
    bias = 0.1 * jax.random.normal(k_b, (D_OUT,), dtype=jnp.float32)

    # Symmetric, row-normalized dense adjacency (synthetic).
    a_raw = jax.random.uniform(k_a, (N, N), dtype=jnp.float32)
    adj = (a_raw + a_raw.T) * 0.5
    adj = adj / jnp.sum(adj, axis=1, keepdims=True)

    # One-time setup cast (NOT per forward call) — per performance review.
    adj_bf, x_bf = prepare_graph(adj, inputs)
    w_bf = weight.astype(jnp.bfloat16)

    # bf16-consistent reference (same dtype pipeline as the kernels).
    support_ref = jnp.dot(
        x_bf, w_bf, preferred_element_type=jnp.float32
    ).astype(jnp.bfloat16)
    ref = jnp.dot(adj_bf, support_ref, preferred_element_type=jnp.float32)

    # No-bias path (PyTorch default bias=False).
    out = graph_convolution(x_bf, w_bf, adj_bf, bias=None)
    out = jax.block_until_ready(out)
    assert out.shape == (N, D_OUT)
    assert out.dtype == jnp.float32
    assert jnp.allclose(out, ref, atol=1e-2, rtol=1e-2)

    # Fused-bias path.
    out_b = graph_convolution(x_bf, w_bf, adj_bf, bias=bias)
    out_b = jax.block_until_ready(out_b)
    assert jnp.allclose(out_b, ref + bias[None, :], atol=1e-2, rtol=1e-2)

    print("KERNEL_OK")
</pallas_src>

<mosaic_0001>
module attributes {stable_mosaic.version = 11 : i64} {
  func.func @_support_kernel(%arg0: i32, %arg1: memref<256x128xbf16, #tpu.memory_space<vmem>>, %arg2: memref<128x128xbf16, #tpu.memory_space<vmem>>, %arg3: memref<256x128xbf16, #tpu.memory_space<vmem>>) attributes {dimension_semantics = [#tpu.dimension_semantics<parallel>], iteration_bounds = array<i64: 1>, scalar_prefetch = 0 : i64, scratch_operands = 0 : i64, tpu.core_type = #tpu.core_type<tc>, window_params = [{transform_indices = @transform_0, window_bounds = array<i64: 256, 128>}, {pipeline_mode = #tpu.pipeline_mode<synchronous>, transform_indices = @transform_1, window_bounds = array<i64: 128, 128>}, {transform_indices = @transform_2, window_bounds = array<i64: 256, 128>}]} {
    %c0 = arith.constant 0 : index
    %c0_0 = arith.constant 0 : index
    %0 = vector.load %arg1[%c0, %c0_0] : memref<256x128xbf16, #tpu.memory_space<vmem>>, vector<256x128xbf16>
    %c0_1 = arith.constant 0 : index
    %c0_2 = arith.constant 0 : index
    %1 = vector.load %arg2[%c0_1, %c0_2] : memref<128x128xbf16, #tpu.memory_space<vmem>>, vector<128x128xbf16>
    %cst = arith.constant dense<0.000000e+00> : vector<256x128xf32>
    %2 = tpu.matmul %0, %1, %cst {dimension_numbers = #tpu.dot_dimension_numbers<[1], [0], [0], [1], [0, 0, 1, 1], [], []>} : vector<256x128xbf16>, vector<128x128xbf16>, vector<256x128xf32> -> vector<256x128xf32>
    %3 = arith.truncf %2 : vector<256x128xf32> to vector<256x128xbf16>
    %c0_3 = arith.constant 0 : index
    %c0_4 = arith.constant 0 : index
    %4 = vector.load %arg3[%c0_3, %c0_4] : memref<256x128xbf16, #tpu.memory_space<vmem>>, vector<256x128xbf16>
    tpu.vector_store %arg3[%c0_3, %c0_4], %3 {strides = array<i32>} : memref<256x128xbf16, #tpu.memory_space<vmem>>, vector<256x128xbf16>,
    return
  }
  func.func @transform_0(%arg0: i32) -> (i32, i32) {
    %c0_i32 = arith.constant 0 : i32
    %c0_i32_0 = arith.constant 0 : i32
    return %arg0, %c0_i32 : i32, i32
  }
  func.func @transform_1(%arg0: i32) -> (i32, i32) {
    %c0_i32 = arith.constant 0 : i32
    %c0_i32_0 = arith.constant 0 : i32
    %c0_i32_1 = arith.constant 0 : i32
    return %c0_i32, %c0_i32_0 : i32, i32
  }
  func.func @transform_2(%arg0: i32) -> (i32, i32) {
    %c0_i32 = arith.constant 0 : i32
    %c0_i32_0 = arith.constant 0 : i32
    return %arg0, %c0_i32 : i32, i32
  }
}

module attributes {stable_mosaic.version = 11 : i64} {
  func.func @_aggregate_kernel(%arg0: i32, %arg1: i32, %arg2: memref<256x256xbf16, #tpu.memory_space<vmem>>, %arg3: memref<256x128xbf16, #tpu.memory_space<vmem>>, %arg4: memref<256x128xf32, #tpu.memory_space<vmem>>, %arg5: memref<256x128xf32, #tpu.memory_space<vmem>>) attributes {dimension_semantics = [#tpu.dimension_semantics<parallel>, #tpu.dimension_semantics<arbitrary>], iteration_bounds = array<i64: 1, 1>, scalar_prefetch = 0 : i64, scratch_operands = 1 : i64, tpu.core_type = #tpu.core_type<tc>, window_params = [{transform_indices = @transform_0, window_bounds = array<i64: 256, 256>}, {transform_indices = @transform_1, window_bounds = array<i64: 256, 128>}, {transform_indices = @transform_2, window_bounds = array<i64: 256, 128>}]} {
    %c0_i32 = arith.constant 0 : i32
    %0 = arith.cmpi eq, %arg1, %c0_i32 : i32
    %1 = arith.extui %0 : i1 to i32
    %c0_i32_0 = arith.constant 0 : i32
    %2 = arith.cmpi ne, %1, %c0_i32_0 : i32
    scf.if %2 {
      %cst_10 = arith.constant 0.000000e+00 : f32
      %12 = vector.broadcast %cst_10 : f32 to vector<256x128xf32>
      %c0_11 = arith.constant 0 : index
      %c0_12 = arith.constant 0 : index
      %13 = vector.load %arg5[%c0_11, %c0_12] : memref<256x128xf32, #tpu.memory_space<vmem>>, vector<256x128xf32>
      tpu.vector_store %arg5[%c0_11, %c0_12], %12 {strides = array<i32>} : memref<256x128xf32, #tpu.memory_space<vmem>>, vector<256x128xf32>,
    } else {
    }
    %c0 = arith.constant 0 : index
    %c0_1 = arith.constant 0 : index
    %3 = vector.load %arg5[%c0, %c0_1] : memref<256x128xf32, #tpu.memory_space<vmem>>, vector<256x128xf32>
    %c0_2 = arith.constant 0 : index
    %c0_3 = arith.constant 0 : index
    %4 = vector.load %arg2[%c0_2, %c0_3] : memref<256x256xbf16, #tpu.memory_space<vmem>>, vector<256x256xbf16>
    %c0_4 = arith.constant 0 : index
    %c0_5 = arith.constant 0 : index
    %5 = vector.load %arg3[%c0_4, %c0_5] : memref<256x128xbf16, #tpu.memory_space<vmem>>, vector<256x128xbf16>
    %cst = arith.constant dense<0.000000e+00> : vector<256x128xf32>
    %6 = tpu.matmul %4, %5, %cst {dimension_numbers = #tpu.dot_dimension_numbers<[1], [0], [0], [1], [0, 0, 1, 1], [], []>} : vector<256x256xbf16>, vector<256x128xbf16>, vector<256x128xf32> -> vector<256x128xf32>
    %7 = arith.addf %3, %6 : vector<256x128xf32>
    %c0_6 = arith.constant 0 : index
    %c0_7 = arith.constant 0 : index
    %8 = vector.load %arg5[%c0_6, %c0_7] : memref<256x128xf32, #tpu.memory_space<vmem>>, vector<256x128xf32>
    tpu.vector_store %arg5[%c0_6, %c0_7], %7 {strides = array<i32>} : memref<256x128xf32, #tpu.memory_space<vmem>>, vector<256x128xf32>,
    %c0_i32_8 = arith.constant 0 : i32
    %9 = arith.cmpi eq, %arg1, %c0_i32_8 : i32
    %10 = arith.extui %9 : i1 to i32
    %c0_i32_9 = arith.constant 0 : i32
    %11 = arith.cmpi ne, %10, %c0_i32_9 : i32
    scf.if %11 {
      %c0_10 = arith.constant 0 : index
      %c0_11 = arith.constant 0 : index
      %12 = vector.load %arg5[%c0_10, %c0_11] : memref<256x128xf32, #tpu.memory_space<vmem>>, vector<256x128xf32>
      %c0_12 = arith.constant 0 : index
      %c0_13 = arith.constant 0 : index
      %13 = vector.load %arg4[%c0_12, %c0_13] : memref<256x128xf32, #tpu.memory_space<vmem>>, vector<256x128xf32>
      tpu.vector_store %arg4[%c0_12, %c0_13], %12 {strides = array<i32>} : memref<256x128xf32, #tpu.memory_space<vmem>>, vector<256x128xf32>,
    } else {
    }
    return
  }
  func.func @transform_0(%arg0: i32, %arg1: i32) -> (i32, i32) {
    %c0_i32 = arith.constant 0 : i32
    return %arg0, %arg1 : i32, i32
  }
  func.func @transform_1(%arg0: i32, %arg1: i32) -> (i32, i32) {
    %c0_i32 = arith.constant 0 : i32
    %c0_i32_0 = arith.constant 0 : i32
    return %arg1, %c0_i32 : i32, i32
  }
  func.func @transform_2(%arg0: i32, %arg1: i32) -> (i32, i32) {
    %c0_i32 = arith.constant 0 : i32
    %c0_i32_0 = arith.constant 0 : i32
    return %arg0, %c0_i32 : i32, i32
  }
}

</mosaic_0001>

<llo_original>
// kernel: graph_convolution.3
$region0: #{graph_convolution.3}
  #allocation0 [shape = 'u32[]', space=smem, size = 0x4, offset = 0x4, fixed_abs, tag = 'smem constant byte address 0x4 - core index']
  #allocation1 [shape = 'u32[144,128]{1,0:T(1,128)}', space=vmem, size = 0x12000, scoped, tag = 'internal scratch']
  #allocation2 [shape = 'f32[256,128]{1,0:T(8,128)}', space=vmem, size = 0x20000, scoped, tag = 'scratch operand']
  %s0 = inlined_call_operand.vmem [shape: bf16[256,256], index: 0, kind: input, shape index: {}]
  %s1 = inlined_call_operand.vmem [shape: bf16[256,128], index: 1, kind: input, shape index: {}]
  %s2 = inlined_call_operand.hbm [shape: f32[256,128], index: 2, kind: output, shape index: {}]
  %s3 = sld [smem:[#allocation0]]
  $region26: #{graph_convolution.3} parent=0
    _
  %s5 = ssub.s32 1, %s3
  %s6 = scalar_select 0, %s5, %s3
  $region1: #{graph_convolution.3} parent=0
    #allocation3 [shape = 'u8[131072]{0}', space=vmem, size = 0x20000, scoped, tag = 'output window, operand 0, single buffered']
    #allocation4 [shape = 's32[1]{0}', space=sflag, size = 0x4, scoped, tag = 'scoped memory for graph_convolution.3']
    %7 = vsyncpa [#allocation4], 0
    // Predicated region
    $region2: #{graph_convolution.3} parent=1 // pred_check
      _
    $region3: #{graph_convolution.3} parent=1 // pred_check_branch
      %9 = sbr.rel (0) target = $region5
    $region4: #{graph_convolution.3} parent=1 // pred_region
      _
    $region5: #{graph_convolution.3} parent=1 // pred_fallthru
      _
    // Predicated region
    $region6: #{graph_convolution.3} parent=1 // pred_check
      _
    $region7: #{graph_convolution.3} parent=1 // pred_check_branch
      %11 = sbr.rel (0) target = $region9
    $region8: #{graph_convolution.3} parent=1 // pred_region
      _
    $region9: #{graph_convolution.3} parent=1 // pred_fallthru
      _
    %p13 = scmp.eq.s32.totalorder 0, 0
    // Predicated region
    $region10: #{graph_convolution.3} parent=1 // pred_check
      %p14 = pneg %p13
    $region11: #{graph_convolution.3} parent=1 // pred_check_branch
      %16 = sbr.rel (%p14) target = $region13
    $region12: #{graph_convolution.3} parent=1 // pred_region
      %17 = vst [vmem:[#allocation2] sm:$0xff] 0.0
      %18 = vst [vmem:[#allocation2 + $0x8] sm:$0xff] 0.0
      %19 = vst [vmem:[#allocation2 + $0x10] sm:$0xff] 0.0
      %20 = vst [vmem:[#allocation2 + $0x18] sm:$0xff] 0.0
      %21 = vst [vmem:[#allocation2 + $0x20] sm:$0xff] 0.0
      %22 = vst [vmem:[#allocation2 + $0x28] sm:$0xff] 0.0
      %23 = vst [vmem:[#allocation2 + $0x30] sm:$0xff] 0.0
      %24 = vst [vmem:[#allocation2 + $0x38] sm:$0xff] 0.0
      %25 = vst [vmem:[#allocation2 + $0x40] sm:$0xff] 0.0
      %26 = vst [vmem:[#allocation2 + $0x48] sm:$0xff] 0.0
      %27 = vst [vmem:[#allocation2 + $0x50] sm:$0xff] 0.0
      %28 = vst [vmem:[#allocation2 + $0x58] sm:$0xff] 0.0
      %29 = vst [vmem:[#allocation2 + $0x60] sm:$0xff] 0.0
      %30 = vst [vmem:[#allocation2 + $0x68] sm:$0xff] 0.0
      %31 = vst [vmem:[#allocation2 + $0x70] sm:$0xff] 0.0
      %32 = vst [vmem:[#allocation2 + $0x78] sm:$0xff] 0.0
      %33 = vst [vmem:[#allocation2 + $0x80] sm:$0xff] 0.0
      %34 = vst [vmem:[#allocation2 + $0x88] sm:$0xff] 0.0
      %35 = vst [vmem:[#allocation2 + $0x90] sm:$0xff] 0.0
      %36 = vst [vmem:[#allocation2 + $0x98] sm:$0xff] 0.0
      %37 = vst [vmem:[#allocation2 + $0xa0] sm:$0xff] 0.0
      %38 = vst [vmem:[#allocation2 + $0xa8] sm:$0xff] 0.0
      %39 = vst [vmem:[#allocation2 + $0xb0] sm:$0xff] 0.0
      %40 = vst [vmem:[#allocation2 + $0xb8] sm:$0xff] 0.0
      %41 = vst [vmem:[#allocation2 + $0xc0] sm:$0xff] 0.0
      %42 = vst [vmem:[#allocation2 + $0xc8] sm:$0xff] 0.0
      %43 = vst [vmem:[#allocation2 + $0xd0] sm:$0xff] 0.0
      %44 = vst [vmem:[#allocation2 + $0xd8] sm:$0xff] 0.0
      %45 = vst [vmem:[#allocation2 + $0xe0] sm:$0xff] 0.0
      %46 = vst [vmem:[#allocation2 + $0xe8] sm:$0xff] 0.0
      %47 = vst [vmem:[#allocation2 + $0xf0] sm:$0xff] 0.0
      %48 = vst [vmem:[#allocation2 + $0xf8] sm:$0xff] 0.0
    $region13: #{graph_convolution.3} parent=1 // pred_fallthru
      _
    %v49 = vld [vmem:[#allocation2] sm:$0xff]
    %v50 = vld [vmem:[#allocation2 + $0x8] sm:$0xff]
    %v51 = vld [vmem:[#allocation2 + $0x10] sm:$0xff]
    %v52 = vld [vmem:[#allocation2 + $0x18] sm:$0xff]
    %v53 = vld [vmem:[#allocation2 + $0x20] sm:$0xff]
    %v54 = vld [vmem:[#allocation2 + $0x28] sm:$0xff]
    %v55 = vld [vmem:[#allocation2 + $0x30] sm:$0xff]
    %v56 = vld [vmem:[#allocation2 + $0x38] sm:$0xff]
    %v57 = vld [vmem:[#allocation2 + $0x40] sm:$0xff]
    %v58 = vld [vmem:[#allocation2 + $0x48] sm:$0xff]
    %v59 = vld [vmem:[#allocation2 + $0x50] sm:$0xff]
    %v60 = vld [vmem:[#allocation2 + $0x58] sm:$0xff]
    %v61 = vld [vmem:[#allocation2 + $0x60] sm:$0xff]
    %v62 = vld [vmem:[#allocation2 + $0x68] sm:$0xff]
    %v63 = vld [vmem:[#allocation2 + $0x70] sm:$0xff]
    %v64 = vld [vmem:[#allocation2 + $0x78] sm:$0xff]
    %v65 = vld [vmem:[#allocation2 + $0x80] sm:$0xff]
    %v66 = vld [vmem:[#allocation2 + $0x88] sm:$0xff]
    %v67 = vld [vmem:[#allocation2 + $0x90] sm:$0xff]
    %v68 = vld [vmem:[#allocation2 + $0x98] sm:$0xff]
    %v69 = vld [vmem:[#allocation2 + $0xa0] sm:$0xff]
    %v70 = vld [vmem:[#allocation2 + $0xa8] sm:$0xff]
    %v71 = vld [vmem:[#allocation2 + $0xb0] sm:$0xff]
    %v72 = vld [vmem:[#allocation2 + $0xb8] sm:$0xff]
    %v73 = vld [vmem:[#allocation2 + $0xc0] sm:$0xff]
    %v74 = vld [vmem:[#allocation2 + $0xc8] sm:$0xff]
    %v75 = vld [vmem:[#allocation2 + $0xd0] sm:$0xff]
    %v76 = vld [vmem:[#allocation2 + $0xd8] sm:$0xff]
    %v77 = vld [vmem:[#allocation2 + $0xe0] sm:$0xff]
    %v78 = vld [vmem:[#allocation2 + $0xe8] sm:$0xff]
    %v79 = vld [vmem:[#allocation2 + $0xf0] sm:$0xff]
    %v80 = vld [vmem:[#allocation2 + $0xf8] sm:$0xff]
    %v81 = vld [vmem:[%s0] sm:$0xff]
    %v82 = vld [vmem:[%s0 + $0x8] sm:$0xff]
    %v83 = vld [vmem:[%s0 + $0x10] sm:$0xff]
    %v84 = vld [vmem:[%s0 + $0x18] sm:$0xff]
    %v85 = vld [vmem:[%s0 + $0x20] sm:$0xff]
    %v86 = vld [vmem:[%s0 + $0x28] sm:$0xff]
    %v87 = vld [vmem:[%s0 + $0x30] sm:$0xff]
    %v88 = vld [vmem:[%s0 + $0x38] sm:$0xff]
    %v89 = vld [vmem:[%s0 + $0x40] sm:$0xff]
    %v90 = vld [vmem:[%s0 + $0x48] sm:$0xff]
    %v91 = vld [vmem:[%s0 + $0x50] sm:$0xff]
    %v92 = vld [vmem:[%s0 + $0x58] sm:$0xff]
    %v93 = vld [vmem:[%s0 + $0x60] sm:$0xff]
    %v94 = vld [vmem:[%s0 + $0x68] sm:$0xff]
    %v95 = vld [vmem:[%s0 + $0x70] sm:$0xff]
    %v96 = vld [vmem:[%s0 + $0x78] sm:$0xff]
    %v97 = vld [vmem:[%s0 + $0x80] sm:$0xff]
    %v98 = vld [vmem:[%s0 + $0x88] sm:$0xff]
    %v99 = vld [vmem:[%s0 + $0x90] sm:$0xff]
    %v100 = vld [vmem:[%s0 + $0x98] sm:$0xff]
    %v101 = vld [vmem:[%s0 + $0xa0] sm:$0xff]
    %v102 = vld [vmem:[%s0 + $0xa8] sm:$0xff]
    %v103 = vld [vmem:[%s0 + $0xb0] sm:$0xff]
    %v104 = vld [vmem:[%s0 + $0xb8] sm:$0xff]
    %v105 = vld [vmem:[%s0 + $0xc0] sm:$0xff]
    %v106 = vld [vmem:[%s0 + $0xc8] sm:$0xff]
    %v107 = vld [vmem:[%s0 + $0xd0] sm:$0xff]
    %v108 = vld [vmem:[%s0 + $0xd8] sm:$0xff]
    %v109 = vld [vmem:[%s0 + $0xe0] sm:$0xff]
    %v110 = vld [vmem:[%s0 + $0xe8] sm:$0xff]
    %v111 = vld [vmem:[%s0 + $0xf0] sm:$0xff]
    %v112 = vld [vmem:[%s0 + $0xf8] sm:$0xff]
    %v113 = vld [vmem:[%s1] sm:$0xf]
    %v114 = vld [vmem:[%s1 + $0x4] sm:$0xf]
    %v115 = vld [vmem:[%s1 + $0x8] sm:$0xf]
    %v116 = vld [vmem:[%s1 + $0xc] sm:$0xf]
    %v117 = vld [vmem:[%s1 + $0x10] sm:$0xf]
    %v118 = vld [vmem:[%s1 + $0x14] sm:$0xf]
    %v119 = vld [vmem:[%s1 + $0x18] sm:$0xf]
    %v120 = vld [vmem:[%s1 + $0x1c] sm:$0xf]
    %v121 = vld [vmem:[%s1 + $0x20] sm:$0xf]
    %v122 = vld [vmem:[%s1 + $0x24] sm:$0xf]
    %v123 = vld [vmem:[%s1 + $0x28] sm:$0xf]
    %v124 = vld [vmem:[%s1 + $0x2c] sm:$0xf]
    %v125 = vld [vmem:[%s1 + $0x30] sm:$0xf]
    %v126 = vld [vmem:[%s1 + $0x34] sm:$0xf]
    %v127 = vld [vmem:[%s1 + $0x38] sm:$0xf]
    %v128 = vld [vmem:[%s1 + $0x3c] sm:$0xf]
    %v129 = vld [vmem:[%s1 + $0x40] sm:$0xf]
    %v130 = vld [vmem:[%s1 + $0x44] sm:$0xf]
    %v131 = vld [vmem:[%s1 + $0x48] sm:$0xf]
    %v132 = vld [vmem:[%s1 + $0x4c] sm:$0xf]
    %v133 = vld [vmem:[%s1 + $0x50] sm:$0xf]
    %v134 = vld [vmem:[%s1 + $0x54] sm:$0xf]
    %v135 = vld [vmem:[%s1 + $0x58] sm:$0xf]
    %v136 = vld [vmem:[%s1 + $0x5c] sm:$0xf]
    %v137 = vld [vmem:[%s1 + $0x60] sm:$0xf]
    %v138 = vld [vmem:[%s1 + $0x64] sm:$0xf]
    %v139 = vld [vmem:[%s1 + $0x68] sm:$0xf]
    %v140 = vld [vmem:[%s1 + $0x6c] sm:$0xf]
    %v141 = vld [vmem:[%s1 + $0x70] sm:$0xf]
    %v142 = vld [vmem:[%s1 + $0x74] sm:$0xf]
    %v143 = vld [vmem:[%s1 + $0x78] sm:$0xf]
    %v144 = vld [vmem:[%s1 + $0x7c] sm:$0xf]
    %v177 = vunpack.c.l.b16 %v81
    %v178 = vunpack.c.h.b16 %v81
    %v179 = vunpack.c.l.b16 %v82
    %v180 = vunpack.c.h.b16 %v82
    %v181 = vunpack.c.l.b16 %v83
    %v182 = vunpack.c.h.b16 %v83
    %v183 = vunpack.c.l.b16 %v84
    %v184 = vunpack.c.h.b16 %v84
    %v185 = vunpack.c.l.b16 %v85
    %v186 = vunpack.c.h.b16 %v85
    %v187 = vunpack.c.l.b16 %v86
    %v188 = vunpack.c.h.b16 %v86
    %v189 = vunpack.c.l.b16 %v87
    %v190 = vunpack.c.h.b16 %v87
    %v191 = vunpack.c.l.b16 %v88
    %v192 = vunpack.c.h.b16 %v88
    %v193 = vunpack.c.l.b16 %v89
    %v194 = vunpack.c.h.b16 %v89
    %v195 = vunpack.c.l.b16 %v90
    %v196 = vunpack.c.h.b16 %v90
    %v197 = vunpack.c.l.b16 %v91
    %v198 = vunpack.c.h.b16 %v91
    %v199 = vunpack.c.l.b16 %v92
    %v200 = vunpack.c.h.b16 %v92
    %v201 = vunpack.c.l.b16 %v93
    %v202 = vunpack.c.h.b16 %v93
    %v203 = vunpack.c.l.b16 %v94
    %v204 = vunpack.c.h.b16 %v94
    %v205 = vunpack.c.l.b16 %v95
    %v206 = vunpack.c.h.b16 %v95
    %v207 = vunpack.c.l.b16 %v96
    %v208 = vunpack.c.h.b16 %v96
    %v209 = vunpack.c.l.b16 %v97
    %v210 = vunpack.c.h.b16 %v97
    %v211 = vunpack.c.l.b16 %v98
    %v212 = vunpack.c.h.b16 %v98
    %v213 = vunpack.c.l.b16 %v99
    %v214 = vunpack.c.h.b16 %v99
    %v215 = vunpack.c.l.b16 %v100
    %v216 = vunpack.c.h.b16 %v100
    %v217 = vunpack.c.l.b16 %v101
    %v218 = vunpack.c.h.b16 %v101
    %v219 = vunpack.c.l.b16 %v102
    %v220 = vunpack.c.h.b16 %v102
    %v221 = vunpack.c.l.b16 %v103
    %v222 = vunpack.c.h.b16 %v103
    %v223 = vunpack.c.l.b16 %v104
    %v224 = vunpack.c.h.b16 %v104
    %v225 = vunpack.c.l.b16 %v105
    %v226 = vunpack.c.h.b16 %v105
    %v227 = vunpack.c.l.b16 %v106
    %v228 = vunpack.c.h.b16 %v106
    %v229 = vunpack.c.l.b16 %v107
    %v230 = vunpack.c.h.b16 %v107
    %v231 = vunpack.c.l.b16 %v108
    %v232 = vunpack.c.h.b16 %v108
    %v233 = vunpack.c.l.b16 %v109
    %v234 = vunpack.c.h.b16 %v109
    %v235 = vunpack.c.l.b16 %v110
    %v236 = vunpack.c.h.b16 %v110
    %v237 = vunpack.c.l.b16 %v111
    %v238 = vunpack.c.h.b16 %v111
    %v239 = vunpack.c.l.b16 %v112
    %v240 = vunpack.c.h.b16 %v112
    %v241 = vpack.c.b16 %v179, %v177
    %v242 = vpack.c.b16 %v180, %v178
    %v243 = vpack.c.b16 %v183, %v181
    %v244 = vpack.c.b16 %v184, %v182
    %v245 = vpack.c.b16 %v187, %v185
    %v246 = vpack.c.b16 %v188, %v186
    %v247 = vpack.c.b16 %v191, %v189
    %v248 = vpack.c.b16 %v192, %v190
    %v249 = vpack.c.b16 %v195, %v193
    %v250 = vpack.c.b16 %v196, %v194
    %v251 = vpack.c.b16 %v199, %v197
    %v252 = vpack.c.b16 %v200, %v198
    %v253 = vpack.c.b16 %v203, %v201
    %v254 = vpack.c.b16 %v204, %v202
    %v255 = vpack.c.b16 %v207, %v205
    %v256 = vpack.c.b16 %v208, %v206
    %v257 = vpack.c.b16 %v211, %v209
    %v258 = vpack.c.b16 %v212, %v210
    %v259 = vpack.c.b16 %v215, %v213
    %v260 = vpack.c.b16 %v216, %v214
    %v261 = vpack.c.b16 %v219, %v217
    %v262 = vpack.c.b16 %v220, %v218
    %v263 = vpack.c.b16 %v223, %v221
    %v264 = vpack.c.b16 %v224, %v222
    %v265 = vpack.c.b16 %v227, %v225
    %v266 = vpack.c.b16 %v228, %v226
    %v267 = vpack.c.b16 %v231, %v229
    %v268 = vpack.c.b16 %v232, %v230
    %v269 = vpack.c.b16 %v235, %v233
    %v270 = vpack.c.b16 %v236, %v234
    %v271 = vpack.c.b16 %v239, %v237
    %v272 = vpack.c.b16 %v240, %v238
    %v337 = vunpack.c.l.b16 %v113
    %v338 = vunpack.c.l.b16 %v114
    %v339 = vunpack.c.l.b16 %v115
    %v340 = vunpack.c.l.b16 %v116
    %v341 = vunpack.c.l.b16 %v117
    %v342 = vunpack.c.l.b16 %v118
    %v343 = vunpack.c.l.b16 %v119
    %v344 = vunpack.c.l.b16 %v120
    %v345 = vunpack.c.l.b16 %v121
    %v346 = vunpack.c.l.b16 %v122
    %v347 = vunpack.c.l.b16 %v123
    %v348 = vunpack.c.l.b16 %v124
    %v349 = vunpack.c.l.b16 %v125
    %v350 = vunpack.c.l.b16 %v126
    %v351 = vunpack.c.l.b16 %v127
    %v352 = vunpack.c.l.b16 %v128
    %v353 = vunpack.c.l.b16 %v129
    %v354 = vunpack.c.l.b16 %v130
    %v355 = vunpack.c.l.b16 %v131
    %v356 = vunpack.c.l.b16 %v132
    %v357 = vunpack.c.l.b16 %v133
    %v358 = vunpack.c.l.b16 %v134
    %v359 = vunpack.c.l.b16 %v135
    %v360 = vunpack.c.l.b16 %v136
    %v361 = vunpack.c.l.b16 %v137
    %v362 = vunpack.c.l.b16 %v138
    %v363 = vunpack.c.l.b16 %v139
    %v364 = vunpack.c.l.b16 %v140
    %v365 = vunpack.c.l.b16 %v141
    %v366 = vunpack.c.l.b16 %v142
    %v367 = vunpack.c.l.b16 %v143
    %v368 = vunpack.c.l.b16 %v144
    %v369 = vpack.c.b16 %v338, %v337
    %v370 = vpack.c.b16 %v340, %v339
    %v371 = vpack.c.b16 %v342, %v341
    %v372 = vpack.c.b16 %v344, %v343
    %v373 = vpack.c.b16 %v346, %v345
    %v374 = vpack.c.b16 %v348, %v347
    %v375 = vpack.c.b16 %v350, %v349
    %v376 = vpack.c.b16 %v352, %v351
    %v377 = vpack.c.b16 %v354, %v353
    %v378 = vpack.c.b16 %v356, %v355
    %v379 = vpack.c.b16 %v358, %v357
    %v380 = vpack.c.b16 %v360, %v359
    %v381 = vpack.c.b16 %v362, %v361
    %v382 = vpack.c.b16 %v364, %v363
    %v383 = vpack.c.b16 %v366, %v365
    %v384 = vpack.c.b16 %v368, %v367
    %401 = vmatprep.subr.bf16.mxu0 0
    %402 = vmatpush1.bf16.msra.mxu0 %v369
    %403 = vmatprep.subr.bf16.mxu0 0
    %404 = vmatpush1.bf16.msra.mxu0 %v370
    %405 = vmatprep.subr.bf16.mxu0 0
    %406 = vmatpush1.bf16.msra.mxu0 %v371
    %407 = vmatprep.subr.bf16.mxu0 0
    %408 = vmatpush1.bf16.msra.mxu0 %v372
    %409 = vmatprep.subr.bf16.mxu0 0
    %410 = vmatpush1.bf16.msra.mxu0 %v373
    %411 = vmatprep.subr.bf16.mxu0 0
    %412 = vmatpush1.bf16.msra.mxu0 %v374
    %413 = vmatprep.subr.bf16.mxu0 0
    %414 = vmatpush1.bf16.msra.mxu0 %v375
    %415 = vmatprep.subr.bf16.mxu0 0
    %416 = vmatpush1.bf16.msra.mxu0 %v376
    %417 = vmatprep.subr.bf16.mxu0 0
    %418 = vmatpush1.bf16.msra.mxu0 %v377
    %419 = vmatprep.subr.bf16.mxu0 0
    %420 = vmatpush1.bf16.msra.mxu0 %v378
    %421 = vmatprep.subr.bf16.mxu0 0
    %422 = vmatpush1.bf16.msra.mxu0 %v379
    %423 = vmatprep.subr.bf16.mxu0 0
    %424 = vmatpush1.bf16.msra.mxu0 %v380
    %425 = vmatprep.subr.bf16.mxu0 0
    %426 = vmatpush1.bf16.msra.mxu0 %v381
    %427 = vmatprep.subr.bf16.mxu0 0
    %428 = vmatpush1.bf16.msra.mxu0 %v382
    %429 = vmatprep.subr.bf16.mxu0 0
    %430 = vmatpush1.bf16.msra.mxu0 %v383
    %431 = vmatprep.subr.bf16.mxu0 0
    %432 = vmatpush1.bf16.msra.mxu0 %v384
    %433 = vmatprep.mubr.bf16.mxu0 %v242
    %434 = vmatmul.mubr.bf16.gmra.mrb[0].mxu0 %v241
    %v435 = vpop.f32.mrb[0].mxu0
    %v436 = vadd.f32 0.0, %v435
    %v437 = vpop.f32.mrb[0].mxu0
    %v438 = vpop.f32.mrb[0].mxu0
    %v439 = vadd.f32 0.0, %v438
    %v440 = vpop.f32.mrb[0].mxu0
    %441 = vmatprep.mubr.bf16.mxu0 %v244
    %442 = vmatmul.mubr.bf16.gmra.mrb[0].mxu0 %v243
    %v443 = vpop.f32.mrb[0].mxu0
    %v444 = vadd.f32 0.0, %v443
    %v445 = vpop.f32.mrb[0].mxu0
    %v446 = vpop.f32.mrb[0].mxu0
    %v447 = vadd.f32 0.0, %v446
    %v448 = vpop.f32.mrb[0].mxu0
    %449 = vmatprep.mubr.bf16.mxu0 %v246
    %450 = vmatmul.mubr.bf16.gmra.mrb[0].mxu0 %v245
    %v451 = vpop.f32.mrb[0].mxu0
    %v452 = vadd.f32 0.0, %v451
    %v453 = vpop.f32.mrb[0].mxu0
    %v454 = vpop.f32.mrb[0].mxu0
    %v455 = vadd.f32 0.0, %v454
    %v456 = vpop.f32.mrb[0].mxu0
    %457 = vmatprep.mubr.bf16.mxu0 %v248
    %458 = vmatmul.mubr.bf16.gmra.mrb[0].mxu0 %v247
    %v459 = vpop.f32.mrb[0].mxu0
    %v460 = vadd.f32 0.0, %v459
    %v461 = vpop.f32.mrb[0].mxu0
    %v462 = vpop.f32.mrb[0].mxu0
    %v463 = vadd.f32 0.0, %v462
    %v464 = vpop.f32.mrb[0].mxu0
    %465 = vmatprep.mubr.bf16.mxu0 %v250
    %466 = vmatmul.mubr.bf16.gmra.mrb[0].mxu0 %v249
    %v467 = vpop.f32.mrb[0].mxu0
    %v468 = vadd.f32 0.0, %v467
    %v469 = vpop.f32.mrb[0].mxu0
    %v470 = vpop.f32.mrb[0].mxu0
    %v471 = vadd.f32 0.0, %v470
    %v472 = vpop.f32.mrb[0].mxu0
    %473 = vmatprep.mubr.bf16.mxu0 %v252
    %474 = vmatmul.mubr.bf16.gmra.mrb[0].mxu0 %v251
    %v475 = vpop.f32.mrb[0].mxu0
    %v476 = vadd.f32 0.0, %v475
    %v477 = vpop.f32.mrb[0].mxu0
    %v478 = vpop.f32.mrb[0].mxu0
    %v479 = vadd.f32 0.0, %v478
    %v480 = vpop.f32.mrb[0].mxu0
    %481 = vmatprep.mubr.bf16.mxu0 %v254
    %482 = vmatmul.mubr.bf16.gmra.mrb[0].mxu0 %v253
    %v483 = vpop.f32.mrb[0].mxu0
    %v484 = vadd.f32 0.0, %v483
    %v485 = vpop.f32.mrb[0].mxu0
    %v486 = vpop.f32.mrb[0].mxu0
    %v487 = vadd.f32 0.0, %v486
    %v488 = vpop.f32.mrb[0].mxu0
    %489 = vmatprep.mubr.bf16.mxu0 %v256
    %490 = vmatmul.mubr.bf16.gmra.mrb[0].mxu0 %v255
    %v491 = vpop.f32.mrb[0].mxu0
    %v492 = vadd.f32 0.0, %v491
    %v493 = vpop.f32.mrb[0].mxu0
    %v494 = vpop.f32.mrb[0].mxu0
    %v495 = vadd.f32 0.0, %v494
    %v496 = vpop.f32.mrb[0].mxu0
    %497 = vmatprep.mubr.bf16.mxu0 %v258
    %498 = vmatmul.mubr.bf16.gmra.mrb[0].mxu0 %v257
    %v499 = vpop.f32.mrb[0].mxu0
    %v500 = vadd.f32 0.0, %v499
    %v501 = vpop.f32.mrb[0].mxu0
    %v502 = vpop.f32.mrb[0].mxu0
    %v503 = vadd.f32 0.0, %v502
    %v504 = vpop.f32.mrb[0].mxu0
    %505 = vmatprep.mubr.bf16.mxu0 %v260
    %506 = vmatmul.mubr.bf16.gmra.mrb[0].mxu0 %v259
    %v507 = vpop.f32.mrb[0].mxu0
    %v508 = vadd.f32 0.0, %v507
    %v509 = vpop.f32.mrb[0].mxu0
    %v510 = vpop.f32.mrb[0].mxu0
    %v511 = vadd.f32 0.0, %v510
    %v512 = vpop.f32.mrb[0].mxu0
    %513 = vmatprep.mubr.bf16.mxu0 %v262
    %514 = vmatmul.mubr.bf16.gmra.mrb[0].mxu0 %v261
    %v515 = vpop.f32.mrb[0].mxu0
    %v516 = vadd.f32 0.0, %v515
    %v517 = vpop.f32.mrb[0].mxu0
    %v518 = vpop.f32.mrb[0].mxu0
    %v519 = vadd.f32 0.0, %v518
    %v520 = vpop.f32.mrb[0].mxu0
    %521 = vmatprep.mubr.bf16.mxu0 %v264
    %522 = vmatmul.mubr.bf16.gmra.mrb[0].mxu0 %v263
    %v523 = vpop.f32.mrb[0].mxu0
    %v524 = vadd.f32 0.0, %v523
    %v525 = vpop.f32.mrb[0].mxu0
    %v526 = vpop.f32.mrb[0].mxu0
    %v527 = vadd.f32 0.0, %v526
    %v528 = vpop.f32.mrb[0].mxu0
    %529 = vmatprep.mubr.bf16.mxu0 %v266
    %530 = vmatmul.mubr.bf16.gmra.mrb[0].mxu0 %v265
    %v531 = vpop.f32.mrb[0].mxu0
    %v532 = vadd.f32 0.0, %v531
    %v533 = vpop.f32.mrb[0].mxu0
    %v534 = vpop.f32.mrb[0].mxu0
    %v535 = vadd.f32 0.0, %v534
    %v536 = vpop.f32.mrb[0].mxu0
    %537 = vmatprep.mubr.bf16.mxu0 %v268
    %538 = vmatmul.mubr.bf16.gmra.mrb[0].mxu0 %v267
    %v539 = vpop.f32.mrb[0].mxu0
    %v540 = vadd.f32 0.0, %v539
    %v541 = vpop.f32.mrb[0].mxu0
    %v542 = vpop.f32.mrb[0].mxu0
    %v543 = vadd.f32 0.0, %v542
    %v544 = vpop.f32.mrb[0].mxu0
    %545 = vmatprep.mubr.bf16.mxu0 %v270
    %546 = vmatmul.mubr.bf16.gmra.mrb[0].mxu0 %v269
    %v547 = vpop.f32.mrb[0].mxu0
    %v548 = vadd.f32 0.0, %v547
    %v549 = vpop.f32.mrb[0].mxu0
    %v550 = vpop.f32.mrb[0].mxu0
    %v551 = vadd.f32 0.0, %v550
    %v552 = vpop.f32.mrb[0].mxu0
    %553 = vmatprep.mubr.bf16.mxu0 %v272
    %554 = vmatmul.mubr.bf16.gmra.mrb[0].mxu0 %v271
    %v555 = vpop.f32.mrb[0].mxu0
    %v556 = vadd.f32 0.0, %v555
    %v557 = vpop.f32.mrb[0].mxu0
    %v558 = vpop.f32.mrb[0].mxu0
    %v559 = vadd.f32 0.0, %v558
    %v560 = vpop.f32.mrb[0].mxu0
    %561 = vdwg.mxu0
    %v562 = vadd.f32 %v49, %v436
    %v563 = vadd.f32 %v50, %v439
    %v564 = vadd.f32 %v51, %v444
    %v565 = vadd.f32 %v52, %v447
    %v566 = vadd.f32 %v53, %v452
    %v567 = vadd.f32 %v54, %v455
    %v568 = vadd.f32 %v55, %v460
    %v569 = vadd.f32 %v56, %v463
    %v570 = vadd.f32 %v57, %v468
    %v571 = vadd.f32 %v58, %v471
    %v572 = vadd.f32 %v59, %v476
    %v573 = vadd.f32 %v60, %v479
    %v574 = vadd.f32 %v61, %v484
    %v575 = vadd.f32 %v62, %v487
    %v576 = vadd.f32 %v63, %v492
    %v577 = vadd.f32 %v64, %v495
    %v578 = vadd.f32 %v65, %v500
    %v579 = vadd.f32 %v66, %v503
    %v580 = vadd.f32 %v67, %v508
    %v581 = vadd.f32 %v68, %v511
    %v582 = vadd.f32 %v69, %v516
    %v583 = vadd.f32 %v70, %v519
    %v584 = vadd.f32 %v71, %v524
    %v585 = vadd.f32 %v72, %v527
    %v586 = vadd.f32 %v73, %v532
    %v587 = vadd.f32 %v74, %v535
    %v588 = vadd.f32 %v75, %v540
    %v589 = vadd.f32 %v76, %v543
    %v590 = vadd.f32 %v77, %v548
    %v591 = vadd.f32 %v78, %v551
    %v592 = vadd.f32 %v79, %v556
    %v593 = vadd.f32 %v80, %v559
    %594 = vst [vmem:[#allocation2] sm:$0xff] %v562
    %595 = vst [vmem:[#allocation2 + $0x8] sm:$0xff] %v563
    %596 = vst [vmem:[#allocation2 + $0x10] sm:$0xff] %v564
    %597 = vst [vmem:[#allocation2 + $0x18] sm:$0xff] %v565
    %598 = vst [vmem:[#allocation2 + $0x20] sm:$0xff] %v566
    %599 = vst [vmem:[#allocation2 + $0x28] sm:$0xff] %v567
    %600 = vst [vmem:[#allocation2 + $0x30] sm:$0xff] %v568
    %601 = vst [vmem:[#allocation2 + $0x38] sm:$0xff] %v569
    %602 = vst [vmem:[#allocation2 + $0x40] sm:$0xff] %v570
    %603 = vst [vmem:[#allocation2 + $0x48] sm:$0xff] %v571
    %604 = vst [vmem:[#allocation2 + $0x50] sm:$0xff] %v572
    %605 = vst [vmem:[#allocation2 + $0x58] sm:$0xff] %v573
    %606 = vst [vmem:[#allocation2 + $0x60] sm:$0xff] %v574
    %607 = vst [vmem:[#allocation2 + $0x68] sm:$0xff] %v575
    %608 = vst [vmem:[#allocation2 + $0x70] sm:$0xff] %v576
    %609 = vst [vmem:[#allocation2 + $0x78] sm:$0xff] %v577
    %610 = vst [vmem:[#allocation2 + $0x80] sm:$0xff] %v578
    %611 = vst [vmem:[#allocation2 + $0x88] sm:$0xff] %v579
    %612 = vst [vmem:[#allocation2 + $0x90] sm:$0xff] %v580
    %613 = vst [vmem:[#allocation2 + $0x98] sm:$0xff] %v581
    %614 = vst [vmem:[#allocation2 + $0xa0] sm:$0xff] %v582
    %615 = vst [vmem:[#allocation2 + $0xa8] sm:$0xff] %v583
    %616 = vst [vmem:[#allocation2 + $0xb0] sm:$0xff] %v584
    %617 = vst [vmem:[#allocation2 + $0xb8] sm:$0xff] %v585
    %618 = vst [vmem:[#allocation2 + $0xc0] sm:$0xff] %v586
    %619 = vst [vmem:[#allocation2 + $0xc8] sm:$0xff] %v587
    %620 = vst [vmem:[#allocation2 + $0xd0] sm:$0xff] %v588
    %621 = vst [vmem:[#allocation2 + $0xd8] sm:$0xff] %v589
    %622 = vst [vmem:[#allocation2 + $0xe0] sm:$0xff] %v590
    %623 = vst [vmem:[#allocation2 + $0xe8] sm:$0xff] %v591
    %624 = vst [vmem:[#allocation2 + $0xf0] sm:$0xff] %v592
    %625 = vst [vmem:[#allocation2 + $0xf8] sm:$0xff] %v593
    // Predicated region
    $region14: #{graph_convolution.3} parent=1 // pred_check
      %p626 = pneg %p13
    $region15: #{graph_convolution.3} parent=1 // pred_check_branch
      %628 = sbr.rel (%p626) target = $region17
    $region16: #{graph_convolution.3} parent=1 // pred_region
      %v629 = vld [vmem:[#allocation2] sm:$0xff]
      %v630 = vld [vmem:[#allocation2 + $0x8] sm:$0xff]
      %v631 = vld [vmem:[#allocation2 + $0x10] sm:$0xff]
      %v632 = vld [vmem:[#allocation2 + $0x18] sm:$0xff]
      %v633 = vld [vmem:[#allocation2 + $0x20] sm:$0xff]
      %v634 = vld [vmem:[#allocation2 + $0x28] sm:$0xff]
      %v635 = vld [vmem:[#allocation2 + $0x30] sm:$0xff]
      %v636 = vld [vmem:[#allocation2 + $0x38] sm:$0xff]
      %v637 = vld [vmem:[#allocation2 + $0x40] sm:$0xff]
      %v638 = vld [vmem:[#allocation2 + $0x48] sm:$0xff]
      %v639 = vld [vmem:[#allocation2 + $0x50] sm:$0xff]
      %v640 = vld [vmem:[#allocation2 + $0x58] sm:$0xff]
      %v641 = vld [vmem:[#allocation2 + $0x60] sm:$0xff]
      %v642 = vld [vmem:[#allocation2 + $0x68] sm:$0xff]
      %v643 = vld [vmem:[#allocation2 + $0x70] sm:$0xff]
      %v644 = vld [vmem:[#allocation2 + $0x78] sm:$0xff]
      %v645 = vld [vmem:[#allocation2 + $0x80] sm:$0xff]
      %v646 = vld [vmem:[#allocation2 + $0x88] sm:$0xff]
      %v647 = vld [vmem:[#allocation2 + $0x90] sm:$0xff]
      %v648 = vld [vmem:[#allocation2 + $0x98] sm:$0xff]
      %v649 = vld [vmem:[#allocation2 + $0xa0] sm:$0xff]
      %v650 = vld [vmem:[#allocation2 + $0xa8] sm:$0xff]
      %v651 = vld [vmem:[#allocation2 + $0xb0] sm:$0xff]
      %v652 = vld [vmem:[#allocation2 + $0xb8] sm:$0xff]
      %v653 = vld [vmem:[#allocation2 + $0xc0] sm:$0xff]
      %v654 = vld [vmem:[#allocation2 + $0xc8] sm:$0xff]
      %v655 = vld [vmem:[#allocation2 + $0xd0] sm:$0xff]
      %v656 = vld [vmem:[#allocation2 + $0xd8] sm:$0xff]
      %v657 = vld [vmem:[#allocation2 + $0xe0] sm:$0xff]
      %v658 = vld [vmem:[#allocation2 + $0xe8] sm:$0xff]
      %v659 = vld [vmem:[#allocation2 + $0xf0] sm:$0xff]
      %v660 = vld [vmem:[#allocation2 + $0xf8] sm:$0xff]
      %661 = vst [vmem:[#allocation3] sm:$0xff] %v629
      %662 = vst [vmem:[#allocation3 + $0x8] sm:$0xff] %v630
      %663 = vst [vmem:[#allocation3 + $0x10] sm:$0xff] %v631
      %664 = vst [vmem:[#allocation3 + $0x18] sm:$0xff] %v632
      %665 = vst [vmem:[#allocation3 + $0x20] sm:$0xff] %v633
      %666 = vst [vmem:[#allocation3 + $0x28] sm:$0xff] %v634
      %667 = vst [vmem:[#allocation3 + $0x30] sm:$0xff] %v635
      %668 = vst [vmem:[#allocation3 + $0x38] sm:$0xff] %v636
      %669 = vst [vmem:[#allocation3 + $0x40] sm:$0xff] %v637
      %670 = vst [vmem:[#allocation3 + $0x48] sm:$0xff] %v638
      %671 = vst [vmem:[#allocation3 + $0x50] sm:$0xff] %v639
      %672 = vst [vmem:[#allocation3 + $0x58] sm:$0xff] %v640
      %673 = vst [vmem:[#allocation3 + $0x60] sm:$0xff] %v641
      %674 = vst [vmem:[#allocation3 + $0x68] sm:$0xff] %v642
      %675 = vst [vmem:[#allocation3 + $0x70] sm:$0xff] %v643
      %676 = vst [vmem:[#allocation3 + $0x78] sm:$0xff] %v644
      %677 = vst [vmem:[#allocation3 + $0x80] sm:$0xff] %v645
      %678 = vst [vmem:[#allocation3 + $0x88] sm:$0xff] %v646
      %679 = vst [vmem:[#allocation3 + $0x90] sm:$0xff] %v647
      %680 = vst [vmem:[#allocation3 + $0x98] sm:$0xff] %v648
      %681 = vst [vmem:[#allocation3 + $0xa0] sm:$0xff] %v649
      %682 = vst [vmem:[#allocation3 + $0xa8] sm:$0xff] %v650
      %683 = vst [vmem:[#allocation3 + $0xb0] sm:$0xff] %v651
      %684 = vst [vmem:[#allocation3 + $0xb8] sm:$0xff] %v652
      %685 = vst [vmem:[#allocation3 + $0xc0] sm:$0xff] %v653
      %686 = vst [vmem:[#allocation3 + $0xc8] sm:$0xff] %v654
      %687 = vst [vmem:[#allocation3 + $0xd0] sm:$0xff] %v655
      %688 = vst [vmem:[#allocation3 + $0xd8] sm:$0xff] %v656
      %689 = vst [vmem:[#allocation3 + $0xe0] sm:$0xff] %v657
      %690 = vst [vmem:[#allocation3 + $0xe8] sm:$0xff] %v658
      %691 = vst [vmem:[#allocation3 + $0xf0] sm:$0xff] %v659
      %692 = vst [vmem:[#allocation3 + $0xf8] sm:$0xff] %v660
    $region17: #{graph_convolution.3} parent=1 // pred_fallthru
      _
    // Predicated region
    $region18: #{graph_convolution.3} parent=1 // pred_check
      _
    $region19: #{graph_convolution.3} parent=1 // pred_check_branch
      %694 = sbr.rel (0) target = $region21
    $region20: #{graph_convolution.3} parent=1 // pred_region
      %s696 = ssub.s32 4096, 4096
      %697 = vsyncadd [#allocation4], %s696
      %s698 = sshll.u32 [#allocation3], 4
      %s699 = int_to_ptr.vmem [resolvable:$true] %s698
      %704 = dma.vmem_to_hbm [thread:$0]  %s699, 4096, %s2, [#allocation4], 128, 128, 8
    $region21: #{graph_convolution.3} parent=1 // pred_fallthru
      _
    // Predicated region
    $region22: #{graph_convolution.3} parent=1 // pred_check
      _
    $region23: #{graph_convolution.3} parent=1 // pred_check_branch
      %706 = sbr.rel (0) target = $region25
    $region24: #{graph_convolution.3} parent=1 // pred_region
      %707 = dma.done [#allocation4], 4096
    $region25: #{graph_convolution.3} parent=1 // pred_fallthru
      _
    %708 = vsyncpa [#allocation4], 1

// kernel: graph_convolution.2
$region0: #{graph_convolution.2}
  #allocation0 [shape = 'u32[]', space=smem, size = 0x4, offset = 0x4, fixed_abs, tag = 'smem constant byte address 0x4 - core index']
  #allocation1 [shape = 'u32[144,128]{1,0:T(1,128)}', space=vmem, size = 0x12000, scoped, tag = 'internal scratch']
  %s0 = inlined_call_operand.hbm [shape: bf16[256,128], index: 0, kind: input, shape index: {}]
  %s1 = inlined_call_operand.hbm [shape: bf16[128,128], index: 1, kind: input, shape index: {}]
  %s2 = inlined_call_operand.vmem [shape: bf16[256,128], index: 2, kind: output, shape index: {}]
  %s3 = sld [smem:[#allocation0]]
  $region26: #{graph_convolution.2} parent=0
    _
  %s5 = ssub.s32 1, %s3
  %s6 = scalar_select 0, %s5, %s3
  $region1: #{graph_convolution.2} parent=0
    #allocation2 [shape = 'u8[65536]{0}', space=vmem, size = 0x10000, scoped, tag = 'input window, operand 0, single buffered']
    #allocation3 [shape = 's32[1]{0}', space=sflag, size = 0x4, scoped, tag = 'scoped memory for graph_convolution.2']
    #allocation4 [shape = 'u8[32768]{0}', space=vmem, size = 0x8000, scoped, tag = 'input window, operand 1, single buffered']
    #allocation5 [shape = 's32[1]{0}', space=sflag, size = 0x4, scoped, tag = 'scoped memory for graph_convolution.2']
    %7 = vsyncpa [#allocation3], 0
    %8 = vsyncpa [#allocation5], 0
    // Predicated region
    $region2: #{graph_convolution.2} parent=1 // pred_check
      _
    $region3: #{graph_convolution.2} parent=1 // pred_check_branch
      %10 = sbr.rel (0) target = $region5
    $region4: #{graph_convolution.2} parent=1 // pred_region
      %s12 = ssub.s32 2048, 2048
      %13 = vsyncadd [#allocation3], %s12
      %s14 = sshll.u32 [#allocation2], 4
      %s15 = int_to_ptr.vmem [resolvable:$true] %s14
      %20 = dma.hbm_to_vmem [thread:$0]  %s0, 2048, %s15, [#allocation3], 64, 64, 4
    $region5: #{graph_convolution.2} parent=1 // pred_fallthru
      _
    // Predicated region
    $region6: #{graph_convolution.2} parent=1 // pred_check
      _
    $region7: #{graph_convolution.2} parent=1 // pred_check_branch
      %22 = sbr.rel (0) target = $region9
    $region8: #{graph_convolution.2} parent=1 // pred_region
      %s24 = ssub.s32 1024, 1024
      %25 = vsyncadd [#allocation5], %s24
      %s26 = sshll.u32 [#allocation4], 4
      %s27 = int_to_ptr.vmem [resolvable:$true] %s26
      %32 = dma.hbm_to_vmem [thread:$0]  %s1, 1024, %s27, [#allocation5], 64, 64, 4
    $region9: #{graph_convolution.2} parent=1 // pred_fallthru
      _
    // Predicated region
    $region10: #{graph_convolution.2} parent=1 // pred_check
      _
    $region11: #{graph_convolution.2} parent=1 // pred_check_branch
      %34 = sbr.rel (0) target = $region13
    $region12: #{graph_convolution.2} parent=1 // pred_region
      %35 = dma.done [#allocation3], 2048
    $region13: #{graph_convolution.2} parent=1 // pred_fallthru
      _
    // Predicated region
    $region14: #{graph_convolution.2} parent=1 // pred_check
      _
    $region15: #{graph_convolution.2} parent=1 // pred_check_branch
      %37 = sbr.rel (0) target = $region17
    $region16: #{graph_convolution.2} parent=1 // pred_region
      %38 = dma.done [#allocation5], 1024
    $region17: #{graph_convolution.2} parent=1 // pred_fallthru
      _
    %v40 = vld [vmem:[#allocation2] sm:$0xf]
    %v41 = vld [vmem:[#allocation2 + $0x4] sm:$0xf]
    %v42 = vld [vmem:[#allocation2 + $0x8] sm:$0xf]
    %v43 = vld [vmem:[#allocation2 + $0xc] sm:$0xf]
    %v44 = vld [vmem:[#allocation2 + $0x10] sm:$0xf]
    %v45 = vld [vmem:[#allocation2 + $0x14] sm:$0xf]
    %v46 = vld [vmem:[#allocation2 + $0x18] sm:$0xf]
    %v47 = vld [vmem:[#allocation2 + $0x1c] sm:$0xf]
    %v48 = vld [vmem:[#allocation2 + $0x20] sm:$0xf]
    %v49 = vld [vmem:[#allocation2 + $0x24] sm:$0xf]
    %v50 = vld [vmem:[#allocation2 + $0x28] sm:$0xf]
    %v51 = vld [vmem:[#allocation2 + $0x2c] sm:$0xf]
    %v52 = vld [vmem:[#allocation2 + $0x30] sm:$0xf]
    %v53 = vld [vmem:[#allocation2 + $0x34] sm:$0xf]
    %v54 = vld [vmem:[#allocation2 + $0x38] sm:$0xf]
    %v55 = vld [vmem:[#allocation2 + $0x3c] sm:$0xf]
    %v56 = vld [vmem:[#allocation2 + $0x40] sm:$0xf]
    %v57 = vld [vmem:[#allocation2 + $0x44] sm:$0xf]
    %v58 = vld [vmem:[#allocation2 + $0x48] sm:$0xf]
    %v59 = vld [vmem:[#allocation2 + $0x4c] sm:$0xf]
    %v60 = vld [vmem:[#allocation2 + $0x50] sm:$0xf]
    %v61 = vld [vmem:[#allocation2 + $0x54] sm:$0xf]
    %v62 = vld [vmem:[#allocation2 + $0x58] sm:$0xf]
    %v63 = vld [vmem:[#allocation2 + $0x5c] sm:$0xf]
    %v64 = vld [vmem:[#allocation2 + $0x60] sm:$0xf]
    %v65 = vld [vmem:[#allocation2 + $0x64] sm:$0xf]
    %v66 = vld [vmem:[#allocation2 + $0x68] sm:$0xf]
    %v67 = vld [vmem:[#allocation2 + $0x6c] sm:$0xf]
    %v68 = vld [vmem:[#allocation2 + $0x70] sm:$0xf]
    %v69 = vld [vmem:[#allocation2 + $0x74] sm:$0xf]
    %v70 = vld [vmem:[#allocation2 + $0x78] sm:$0xf]
    %v71 = vld [vmem:[#allocation2 + $0x7c] sm:$0xf]
    %v72 = vld [vmem:[#allocation4] sm:$0xf]
    %v73 = vld [vmem:[#allocation4 + $0x4] sm:$0xf]
    %v74 = vld [vmem:[#allocation4 + $0x8] sm:$0xf]
    %v75 = vld [vmem:[#allocation4 + $0xc] sm:$0xf]
    %v76 = vld [vmem:[#allocation4 + $0x10] sm:$0xf]
    %v77 = vld [vmem:[#allocation4 + $0x14] sm:$0xf]
    %v78 = vld [vmem:[#allocation4 + $0x18] sm:$0xf]
    %v79 = vld [vmem:[#allocation4 + $0x1c] sm:$0xf]
    %v80 = vld [vmem:[#allocation4 + $0x20] sm:$0xf]
    %v81 = vld [vmem:[#allocation4 + $0x24] sm:$0xf]
    %v82 = vld [vmem:[#allocation4 + $0x28] sm:$0xf]
    %v83 = vld [vmem:[#allocation4 + $0x2c] sm:$0xf]
    %v84 = vld [vmem:[#allocation4 + $0x30] sm:$0xf]
    %v85 = vld [vmem:[#allocation4 + $0x34] sm:$0xf]
    %v86 = vld [vmem:[#allocation4 + $0x38] sm:$0xf]
    %v87 = vld [vmem:[#allocation4 + $0x3c] sm:$0xf]
    %v120 = vunpack.c.l.b16 %v40
    %v121 = vunpack.c.l.b16 %v41
    %v122 = vunpack.c.l.b16 %v42
    %v123 = vunpack.c.l.b16 %v43
    %v124 = vunpack.c.l.b16 %v44
    %v125 = vunpack.c.l.b16 %v45
    %v126 = vunpack.c.l.b16 %v46
    %v127 = vunpack.c.l.b16 %v47
    %v128 = vunpack.c.l.b16 %v48
    %v129 = vunpack.c.l.b16 %v49
    %v130 = vunpack.c.l.b16 %v50
    %v131 = vunpack.c.l.b16 %v51
    %v132 = vunpack.c.l.b16 %v52
    %v133 = vunpack.c.l.b16 %v53
    %v134 = vunpack.c.l.b16 %v54
    %v135 = vunpack.c.l.b16 %v55
    %v136 = vunpack.c.l.b16 %v56
    %v137 = vunpack.c.l.b16 %v57
    %v138 = vunpack.c.l.b16 %v58
    %v139 = vunpack.c.l.b16 %v59
    %v140 = vunpack.c.l.b16 %v60
    %v141 = vunpack.c.l.b16 %v61
    %v142 = vunpack.c.l.b16 %v62
    %v143 = vunpack.c.l.b16 %v63
    %v144 = vunpack.c.l.b16 %v64
    %v145 = vunpack.c.l.b16 %v65
    %v146 = vunpack.c.l.b16 %v66
    %v147 = vunpack.c.l.b16 %v67
    %v148 = vunpack.c.l.b16 %v68
    %v149 = vunpack.c.l.b16 %v69
    %v150 = vunpack.c.l.b16 %v70
    %v151 = vunpack.c.l.b16 %v71
    %v152 = vpack.c.b16 %v121, %v120
    %v153 = vpack.c.b16 %v123, %v122
    %v154 = vpack.c.b16 %v125, %v124
    %v155 = vpack.c.b16 %v127, %v126
    %v156 = vpack.c.b16 %v129, %v128
    %v157 = vpack.c.b16 %v131, %v130
    %v158 = vpack.c.b16 %v133, %v132
    %v159 = vpack.c.b16 %v135, %v134
    %v160 = vpack.c.b16 %v137, %v136
    %v161 = vpack.c.b16 %v139, %v138
    %v162 = vpack.c.b16 %v141, %v140
    %v163 = vpack.c.b16 %v143, %v142
    %v164 = vpack.c.b16 %v145, %v144
    %v165 = vpack.c.b16 %v147, %v146
    %v166 = vpack.c.b16 %v149, %v148
    %v167 = vpack.c.b16 %v151, %v150
    %v200 = vunpack.c.l.b16 %v72
    %v201 = vunpack.c.l.b16 %v73
    %v202 = vunpack.c.l.b16 %v74
    %v203 = vunpack.c.l.b16 %v75
    %v204 = vunpack.c.l.b16 %v76
    %v205 = vunpack.c.l.b16 %v77
    %v206 = vunpack.c.l.b16 %v78
    %v207 = vunpack.c.l.b16 %v79
    %v208 = vunpack.c.l.b16 %v80
    %v209 = vunpack.c.l.b16 %v81
    %v210 = vunpack.c.l.b16 %v82
    %v211 = vunpack.c.l.b16 %v83
    %v212 = vunpack.c.l.b16 %v84
    %v213 = vunpack.c.l.b16 %v85
    %v214 = vunpack.c.l.b16 %v86
    %v215 = vunpack.c.l.b16 %v87
    %v216 = vpack.c.b16 %v201, %v200
    %v217 = vpack.c.b16 %v203, %v202
    %v218 = vpack.c.b16 %v205, %v204
    %v219 = vpack.c.b16 %v207, %v206
    %v220 = vpack.c.b16 %v209, %v208
    %v221 = vpack.c.b16 %v211, %v210
    %v222 = vpack.c.b16 %v213, %v212
    %v223 = vpack.c.b16 %v215, %v214
    %232 = vmatprep.subr.bf16.mxu0 0
    %233 = vmatpush1.bf16.msra.mxu0 %v216
    %234 = vmatprep.subr.bf16.mxu0 0
    %235 = vmatpush1.bf16.msra.mxu0 %v217
    %236 = vmatprep.subr.bf16.mxu0 0
    %237 = vmatpush1.bf16.msra.mxu0 %v218
    %238 = vmatprep.subr.bf16.mxu0 0
    %239 = vmatpush1.bf16.msra.mxu0 %v219
    %240 = vmatprep.subr.bf16.mxu0 0
    %241 = vmatpush1.bf16.msra.mxu0 %v220
    %242 = vmatprep.subr.bf16.mxu0 0
    %243 = vmatpush1.bf16.msra.mxu0 %v221
    %244 = vmatprep.subr.bf16.mxu0 0
    %245 = vmatpush1.bf16.msra.mxu0 %v222
    %246 = vmatprep.subr.bf16.mxu0 0
    %247 = vmatpush1.bf16.msra.mxu0 %v223
    %248 = vmatprep.subr.bf16.mxu0 0
    %249 = vmatpush1.bf16.msra.mxu0 0
    %250 = vmatprep.subr.bf16.mxu0 0
    %251 = vmatpush1.bf16.msra.mxu0 0
    %252 = vmatprep.subr.bf16.mxu0 0
    %253 = vmatpush1.bf16.msra.mxu0 0
    %254 = vmatprep.subr.bf16.mxu0 0
    %255 = vmatpush1.bf16.msra.mxu0 0
    %256 = vmatprep.subr.bf16.mxu0 0
    %257 = vmatpush1.bf16.msra.mxu0 0
    %258 = vmatprep.subr.bf16.mxu0 0
    %259 = vmatpush1.bf16.msra.mxu0 0
    %260 = vmatprep.subr.bf16.mxu0 0
    %261 = vmatpush1.bf16.msra.mxu0 0
    %262 = vmatprep.subr.bf16.mxu0 0
    %263 = vmatpush1.bf16.msra.mxu0 0
    %264 = vmatprep.mubr.bf16.mxu0 0
    %265 = vmatmul.mubr.bf16.gmra.mrb[0].mxu0 %v152
    %v266 = vpop.f32.mrb[0].mxu0
    %v267 = vadd.f32 0.0, %v266
    %v268 = vpop.f32.mrb[0].mxu0
    %v269 = vpop.f32.mrb[0].mxu0
    %v270 = vadd.f32 0.0, %v269
    %v271 = vpop.f32.mrb[0].mxu0
    %272 = vmatprep.mubr.bf16.mxu0 0
    %273 = vmatmul.mubr.bf16.gmra.mrb[0].mxu0 %v153
    %v274 = vpop.f32.mrb[0].mxu0
    %v275 = vadd.f32 0.0, %v274
    %v276 = vpop.f32.mrb[0].mxu0
    %v277 = vpop.f32.mrb[0].mxu0
    %v278 = vadd.f32 0.0, %v277
    %v279 = vpop.f32.mrb[0].mxu0
    %280 = vmatprep.mubr.bf16.mxu0 0
    %281 = vmatmul.mubr.bf16.gmra.mrb[0].mxu0 %v154
    %v282 = vpop.f32.mrb[0].mxu0
    %v283 = vadd.f32 0.0, %v282
    %v284 = vpop.f32.mrb[0].mxu0
    %v285 = vpop.f32.mrb[0].mxu0
    %v286 = vadd.f32 0.0, %v285
    %v287 = vpop.f32.mrb[0].mxu0
    %288 = vmatprep.mubr.bf16.mxu0 0
    %289 = vmatmul.mubr.bf16.gmra.mrb[0].mxu0 %v155
    %v290 = vpop.f32.mrb[0].mxu0
    %v291 = vadd.f32 0.0, %v290
    %v292 = vpop.f32.mrb[0].mxu0
    %v293 = vpop.f32.mrb[0].mxu0
    %v294 = vadd.f32 0.0, %v293
    %v295 = vpop.f32.mrb[0].mxu0
    %296 = vmatprep.mubr.bf16.mxu0 0
    %297 = vmatmul.mubr.bf16.gmra.mrb[0].mxu0 %v156
    %v298 = vpop.f32.mrb[0].mxu0
    %v299 = vadd.f32 0.0, %v298
    %v300 = vpop.f32.mrb[0].mxu0
    %v301 = vpop.f32.mrb[0].mxu0
    %v302 = vadd.f32 0.0, %v301
    %v303 = vpop.f32.mrb[0].mxu0
    %304 = vmatprep.mubr.bf16.mxu0 0
    %305 = vmatmul.mubr.bf16.gmra.mrb[0].mxu0 %v157
    %v306 = vpop.f32.mrb[0].mxu0
    %v307 = vadd.f32 0.0, %v306
    %v308 = vpop.f32.mrb[0].mxu0
    %v309 = vpop.f32.mrb[0].mxu0
    %v310 = vadd.f32 0.0, %v309
    %v311 = vpop.f32.mrb[0].mxu0
    %312 = vmatprep.mubr.bf16.mxu0 0
    %313 = vmatmul.mubr.bf16.gmra.mrb[0].mxu0 %v158
    %v314 = vpop.f32.mrb[0].mxu0
    %v315 = vadd.f32 0.0, %v314
    %v316 = vpop.f32.mrb[0].mxu0
    %v317 = vpop.f32.mrb[0].mxu0
    %v318 = vadd.f32 0.0, %v317
    %v319 = vpop.f32.mrb[0].mxu0
    %320 = vmatprep.mubr.bf16.mxu0 0
    %321 = vmatmul.mubr.bf16.gmra.mrb[0].mxu0 %v159
    %v322 = vpop.f32.mrb[0].mxu0
    %v323 = vadd.f32 0.0, %v322
    %v324 = vpop.f32.mrb[0].mxu0
    %v325 = vpop.f32.mrb[0].mxu0
    %v326 = vadd.f32 0.0, %v325
    %v327 = vpop.f32.mrb[0].mxu0
    %328 = vmatprep.mubr.bf16.mxu0 0
    %329 = vmatmul.mubr.bf16.gmra.mrb[0].mxu0 %v160
    %v330 = vpop.f32.mrb[0].mxu0
    %v331 = vadd.f32 0.0, %v330
    %v332 = vpop.f32.mrb[0].mxu0
    %v333 = vpop.f32.mrb[0].mxu0
    %v334 = vadd.f32 0.0, %v333
    %v335 = vpop.f32.mrb[0].mxu0
    %336 = vmatprep.mubr.bf16.mxu0 0
    %337 = vmatmul.mubr.bf16.gmra.mrb[0].mxu0 %v161
    %v338 = vpop.f32.mrb[0].mxu0
    %v339 = vadd.f32 0.0, %v338
    %v340 = vpop.f32.mrb[0].mxu0
    %v341 = vpop.f32.mrb[0].mxu0
    %v342 = vadd.f32 0.0, %v341
    %v343 = vpop.f32.mrb[0].mxu0
    %344 = vmatprep.mubr.bf16.mxu0 0
    %345 = vmatmul.mubr.bf16.gmra.mrb[0].mxu0 %v162
    %v346 = vpop.f32.mrb[0].mxu0
    %v347 = vadd.f32 0.0, %v346
    %v348 = vpop.f32.mrb[0].mxu0
    %v349 = vpop.f32.mrb[0].mxu0
    %v350 = vadd.f32 0.0, %v349
    %v351 = vpop.f32.mrb[0].mxu0
    %352 = vmatprep.mubr.bf16.mxu0 0
    %353 = vmatmul.mubr.bf16.gmra.mrb[0].mxu0 %v163
    %v354 = vpop.f32.mrb[0].mxu0
    %v355 = vadd.f32 0.0, %v354
    %v356 = vpop.f32.mrb[0].mxu0
    %v357 = vpop.f32.mrb[0].mxu0
    %v358 = vadd.f32 0.0, %v357
    %v359 = vpop.f32.mrb[0].mxu0
    %360 = vmatprep.mubr.bf16.mxu0 0
    %361 = vmatmul.mubr.bf16.gmra.mrb[0].mxu0 %v164
    %v362 = vpop.f32.mrb[0].mxu0
    %v363 = vadd.f32 0.0, %v362
    %v364 = vpop.f32.mrb[0].mxu0
    %v365 = vpop.f32.mrb[0].mxu0
    %v366 = vadd.f32 0.0, %v365
    %v367 = vpop.f32.mrb[0].mxu0
    %368 = vmatprep.mubr.bf16.mxu0 0
    %369 = vmatmul.mubr.bf16.gmra.mrb[0].mxu0 %v165
    %v370 = vpop.f32.mrb[0].mxu0
    %v371 = vadd.f32 0.0, %v370
    %v372 = vpop.f32.mrb[0].mxu0
    %v373 = vpop.f32.mrb[0].mxu0
    %v374 = vadd.f32 0.0, %v373
    %v375 = vpop.f32.mrb[0].mxu0
    %376 = vmatprep.mubr.bf16.mxu0 0
    %377 = vmatmul.mubr.bf16.gmra.mrb[0].mxu0 %v166
    %v378 = vpop.f32.mrb[0].mxu0
    %v379 = vadd.f32 0.0, %v378
    %v380 = vpop.f32.mrb[0].mxu0
    %v381 = vpop.f32.mrb[0].mxu0
    %v382 = vadd.f32 0.0, %v381
    %v383 = vpop.f32.mrb[0].mxu0
    %384 = vmatprep.mubr.bf16.mxu0 0
    %385 = vmatmul.mubr.bf16.gmra.mrb[0].mxu0 %v167
    %v386 = vpop.f32.mrb[0].mxu0
    %v387 = vadd.f32 0.0, %v386
    %v388 = vpop.f32.mrb[0].mxu0
    %v389 = vpop.f32.mrb[0].mxu0
    %v390 = vadd.f32 0.0, %v389
    %v391 = vpop.f32.mrb[0].mxu0
    %392 = vdwg.mxu0
    %v393 = vpack.c.bf16 %v270, %v267
    %v394 = vpack.c.bf16 %v278, %v275
    %v395 = vpack.c.bf16 %v286, %v283
    %v396 = vpack.c.bf16 %v294, %v291
    %v397 = vpack.c.bf16 %v302, %v299
    %v398 = vpack.c.bf16 %v310, %v307
    %v399 = vpack.c.bf16 %v318, %v315
    %v400 = vpack.c.bf16 %v326, %v323
    %v401 = vpack.c.bf16 %v334, %v331
    %v402 = vpack.c.bf16 %v342, %v339
    %v403 = vpack.c.bf16 %v350, %v347
    %v404 = vpack.c.bf16 %v358, %v355
    %v405 = vpack.c.bf16 %v366, %v363
    %v406 = vpack.c.bf16 %v374, %v371
    %v407 = vpack.c.bf16 %v382, %v379
    %v408 = vpack.c.bf16 %v390, %v387
    %v425 = vunpack.c.l.b16 %v393
    %v426 = vunpack.c.h.b16 %v393
    %v427 = vunpack.c.l.b16 %v394
    %v428 = vunpack.c.h.b16 %v394
    %v429 = vunpack.c.l.b16 %v395
    %v430 = vunpack.c.h.b16 %v395
    %v431 = vunpack.c.l.b16 %v396
    %v432 = vunpack.c.h.b16 %v396
    %v433 = vunpack.c.l.b16 %v397
    %v434 = vunpack.c.h.b16 %v397
    %v435 = vunpack.c.l.b16 %v398
    %v436 = vunpack.c.h.b16 %v398
    %v437 = vunpack.c.l.b16 %v399
    %v438 = vunpack.c.h.b16 %v399
    %v439 = vunpack.c.l.b16 %v400
    %v440 = vunpack.c.h.b16 %v400
    %v441 = vunpack.c.l.b16 %v401
    %v442 = vunpack.c.h.b16 %v401
    %v443 = vunpack.c.l.b16 %v402
    %v444 = vunpack.c.h.b16 %v402
    %v445 = vunpack.c.l.b16 %v403
    %v446 = vunpack.c.h.b16 %v403
    %v447 = vunpack.c.l.b16 %v404
    %v448 = vunpack.c.h.b16 %v404
    %v449 = vunpack.c.l.b16 %v405
    %v450 = vunpack.c.h.b16 %v405
    %v451 = vunpack.c.l.b16 %v406
    %v452 = vunpack.c.h.b16 %v406
    %v453 = vunpack.c.l.b16 %v407
    %v454 = vunpack.c.h.b16 %v407
    %v455 = vunpack.c.l.b16 %v408
    %v456 = vunpack.c.h.b16 %v408
    %v457 = vpack.c.b16 %v425, %v425
    %v458 = vpack.c.b16 %v426, %v426
    %v459 = vpack.c.b16 %v427, %v427
    %v460 = vpack.c.b16 %v428, %v428
    %v461 = vpack.c.b16 %v429, %v429
    %v462 = vpack.c.b16 %v430, %v430
    %v463 = vpack.c.b16 %v431, %v431
    %v464 = vpack.c.b16 %v432, %v432
    %v465 = vpack.c.b16 %v433, %v433
    %v466 = vpack.c.b16 %v434, %v434
    %v467 = vpack.c.b16 %v435, %v435
    %v468 = vpack.c.b16 %v436, %v436
    %v469 = vpack.c.b16 %v437, %v437
    %v470 = vpack.c.b16 %v438, %v438
    %v471 = vpack.c.b16 %v439, %v439
    %v472 = vpack.c.b16 %v440, %v440
    %v473 = vpack.c.b16 %v441, %v441
    %v474 = vpack.c.b16 %v442, %v442
    %v475 = vpack.c.b16 %v443, %v443
    %v476 = vpack.c.b16 %v444, %v444
    %v477 = vpack.c.b16 %v445, %v445
    %v478 = vpack.c.b16 %v446, %v446
    %v479 = vpack.c.b16 %v447, %v447
    %v480 = vpack.c.b16 %v448, %v448
    %v481 = vpack.c.b16 %v449, %v449
    %v482 = vpack.c.b16 %v450, %v450
    %v483 = vpack.c.b16 %v451, %v451
    %v484 = vpack.c.b16 %v452, %v452
    %v485 = vpack.c.b16 %v453, %v453
    %v486 = vpack.c.b16 %v454, %v454
    %v487 = vpack.c.b16 %v455, %v455
    %v488 = vpack.c.b16 %v456, %v456
    %521 = vst [vmem:[%s2] sm:$0xf] %v457
    %522 = vst [vmem:[%s2 + $0x4] sm:$0xf] %v458
    %523 = vst [vmem:[%s2 + $0x8] sm:$0xf] %v459
    %524 = vst [vmem:[%s2 + $0xc] sm:$0xf] %v460
    %525 = vst [vmem:[%s2 + $0x10] sm:$0xf] %v461
    %526 = vst [vmem:[%s2 + $0x14] sm:$0xf] %v462
    %527 = vst [vmem:[%s2 + $0x18] sm:$0xf] %v463
    %528 = vst [vmem:[%s2 + $0x1c] sm:$0xf] %v464
    %529 = vst [vmem:[%s2 + $0x20] sm:$0xf] %v465
    %530 = vst [vmem:[%s2 + $0x24] sm:$0xf] %v466
    %531 = vst [vmem:[%s2 + $0x28] sm:$0xf] %v467
    %532 = vst [vmem:[%s2 + $0x2c] sm:$0xf] %v468
    %533 = vst [vmem:[%s2 + $0x30] sm:$0xf] %v469
    %534 = vst [vmem:[%s2 + $0x34] sm:$0xf] %v470
    %535 = vst [vmem:[%s2 + $0x38] sm:$0xf] %v471
    %536 = vst [vmem:[%s2 + $0x3c] sm:$0xf] %v472
    %537 = vst [vmem:[%s2 + $0x40] sm:$0xf] %v473
    %538 = vst [vmem:[%s2 + $0x44] sm:$0xf] %v474
    %539 = vst [vmem:[%s2 + $0x48] sm:$0xf] %v475
    %540 = vst [vmem:[%s2 + $0x4c] sm:$0xf] %v476
    %541 = vst [vmem:[%s2 + $0x50] sm:$0xf] %v477
    %542 = vst [vmem:[%s2 + $0x54] sm:$0xf] %v478
    %543 = vst [vmem:[%s2 + $0x58] sm:$0xf] %v479
    %544 = vst [vmem:[%s2 + $0x5c] sm:$0xf] %v480
    %545 = vst [vmem:[%s2 + $0x60] sm:$0xf] %v481
    %546 = vst [vmem:[%s2 + $0x64] sm:$0xf] %v482
    %547 = vst [vmem:[%s2 + $0x68] sm:$0xf] %v483
    %548 = vst [vmem:[%s2 + $0x6c] sm:$0xf] %v484
    %549 = vst [vmem:[%s2 + $0x70] sm:$0xf] %v485
    %550 = vst [vmem:[%s2 + $0x74] sm:$0xf] %v486
    %551 = vst [vmem:[%s2 + $0x78] sm:$0xf] %v487
    %552 = vst [vmem:[%s2 + $0x7c] sm:$0xf] %v488
    // Predicated region
    $region18: #{graph_convolution.2} parent=1 // pred_check
      _
    $region19: #{graph_convolution.2} parent=1 // pred_check_branch
      %554 = sbr.rel (0) target = $region21
    $region20: #{graph_convolution.2} parent=1 // pred_region
      _
    $region21: #{graph_convolution.2} parent=1 // pred_fallthru
      _
    // Predicated region
    $region22: #{graph_convolution.2} parent=1 // pred_check
      _
    $region23: #{graph_convolution.2} parent=1 // pred_check_branch
      %556 = sbr.rel (0) target = $region25
    $region24: #{graph_convolution.2} parent=1 // pred_region
      _
    $region25: #{graph_convolution.2} parent=1 // pred_fallthru
      _
    %557 = vsyncpa [#allocation3], 1
    %558 = vsyncpa [#allocation5], 1

</llo_original>
